<compile_context>
chip_gen: v7x
topology: tpu7x:2x2x1
jax: 0.10.0
libtpu: 0.0.40
codegen_flags: <defaults>
</compile_context>

<pallas_src>
import numpy as np
import jax
import jax.numpy as jnp
from jax.experimental import pallas as pl
from jax.experimental.pallas import tpu as pltpu

N = 7              # n
F_IN = 2 * N       # n + n = 14
H = 32             # hidden width
OUT = 1


def disc_kernel(x_ref, w1_ref, b1_ref, w2_ref, b2_ref, w3_ref, b3_ref, o_ref):
    # Put the batch in lanes: [BT, 14] -> [14, BT] (XLU transpose, MXU is busy).
    xt = x_ref[...].T                                                       # [14, BT]
    # Layer 1: Linear(14 -> 32) + ReLU        (M=32, N=BT on the MXU)
    h = jnp.dot(w1_ref[...], xt, preferred_element_type=jnp.float32)        # [32, BT]
    h = jnp.maximum(h + b1_ref[...], 0.0)
    # Layer 2: Linear(32 -> 32) + ReLU
    h = jnp.dot(w2_ref[...], h, preferred_element_type=jnp.float32)         # [32, BT]
    h = jnp.maximum(h + b2_ref[...], 0.0)
    # Layer 3: Linear(32 -> 1) + Sigmoid      (M=1 -> one MXU push per lane chunk)
    logits = jnp.dot(w3_ref[...], h, preferred_element_type=jnp.float32) + b3_ref[...]  # [1, BT]
    # Lane-dense store: one [1, 1, BT] row per grid step.
    o_ref[...] = jax.nn.sigmoid(logits).reshape(o_ref.shape).astype(o_ref.dtype)


def discriminator_forward(x, w1, b1, w2, b2, w3, b3, *, block_b=4096):
    """Forward pass.

    x : [B, 14] float32
    w1: [32, 14], b1: [32]   (PyTorch Linear convention [out, in])
    w2: [32, 32], b2: [32]
    w3: [1, 32],  b3: [1]
    returns [B, 1] float32
    """
    B, F = x.shape
    assert F == F_IN

    # Batch tile: multiple of 8 sublanes; cap so the grid has >= 2 steps when the
    # batch allows it (both v7x TensorCores get work).  Sweep 2048-8192 for large B.
    block_b = max(8, (block_b // 8) * 8)
    if B >= 16:
        block_b = min(block_b, max(8, (B // 2) // 8 * 8))
    num_blocks = pl.cdiv(B, block_b)

    resident = lambda i: (0, 0)   # weights/biases stay in VMEM across all grid steps

    out = pl.pallas_call(
        disc_kernel,
        out_shape=jax.ShapeDtypeStruct((num_blocks, 1, block_b), jnp.float32),
        grid_spec=pltpu.PrefetchScalarGridSpec(
            num_scalar_prefetch=0,
            grid=(num_blocks,),
            in_specs=[
                pl.BlockSpec((block_b, F_IN), lambda i: (i, 0)),   # x tile (pipelined)
                pl.BlockSpec((H, F_IN), resident),                 # w1  [32, 14]
                pl.BlockSpec((H, 1), resident),                    # b1  [32, 1]
                pl.BlockSpec((H, H), resident),                    # w2  [32, 32]
                pl.BlockSpec((H, 1), resident),                    # b2  [32, 1]
                pl.BlockSpec((OUT, H), resident),                  # w3  [1, 32]
                pl.BlockSpec((OUT, 1), resident),                  # b3  [1, 1]
            ],
            out_specs=pl.BlockSpec((1, 1, block_b), lambda i: (i, 0, 0)),
        ),
        compiler_params=pltpu.CompilerParams(
            dimension_semantics=("parallel",)),   # megacore split on v7x
    )(x, w1, b1.reshape(H, 1), w2, b2.reshape(H, 1), w3, b3.reshape(OUT, 1))

    # Lane-dense [num_blocks, 1, block_b] -> [B, 1]; tail (padded) columns dropped.
    return out.reshape(num_blocks * block_b)[:B].reshape(B, OUT)


def ref_forward(x, w1, b1, w2, b2, w3, b3):
    """Pure-JAX reference matching the PyTorch forward (PyTorch [out,in] weights)."""
    h = jnp.maximum(x @ w1.T + b1, 0.0)
    h = jnp.maximum(h @ w2.T + b2, 0.0)
    return jax.nn.sigmoid(h @ w3.T + b3)


if __name__ == "__main__":
    key = jax.random.PRNGKey(0)
    k_x, k_w1, k_b1, k_w2, k_b2, k_w3, k_b3 = jax.random.split(key, 7)

    B = 16
    x = jax.random.normal(k_x, (B, F_IN), dtype=jnp.float32)

    # Deterministic synthetic parameters (PyTorch Linear convention: [out, in]).
    w1 = jax.random.normal(k_w1, (H, F_IN), dtype=jnp.float32) * 0.2   # Linear(14, 32)
    b1 = jax.random.normal(k_b1, (H,), dtype=jnp.float32) * 0.1
    w2 = jax.random.normal(k_w2, (H, H), dtype=jnp.float32) * 0.2      # Linear(32, 32)
    b2 = jax.random.normal(k_b2, (H,), dtype=jnp.float32) * 0.1
    w3 = jax.random.normal(k_w3, (OUT, H), dtype=jnp.float32) * 0.2    # Linear(32, 1)
    b3 = jax.random.normal(k_b3, (OUT,), dtype=jnp.float32) * 0.1

    out = discriminator_forward(x, w1, b1, w2, b2, w3, b3)   # block_b auto-caps to 8 -> 2 grid steps
    out = jax.block_until_ready(out)

    ref = ref_forward(x, w1, b1, w2, b2, w3, b3)
    np.testing.assert_allclose(np.asarray(out), np.asarray(ref), rtol=1e-5, atol=1e-5)

    print("KERNEL_OK")
</pallas_src>

<mosaic_0001>
module attributes {stable_mosaic.version = 11 : i64} {
  func.func @disc_kernel(%arg0: i32, %arg1: memref<8x14xf32, #tpu.memory_space<vmem>>, %arg2: memref<32x14xf32, #tpu.memory_space<vmem>>, %arg3: memref<32x1xf32, #tpu.memory_space<vmem>>, %arg4: memref<32x32xf32, #tpu.memory_space<vmem>>, %arg5: memref<32x1xf32, #tpu.memory_space<vmem>>, %arg6: memref<1x32xf32, #tpu.memory_space<vmem>>, %arg7: memref<1x1xf32, #tpu.memory_space<vmem>>, %arg8: memref<1x1x8xf32, #tpu.memory_space<vmem>>) attributes {dimension_semantics = [#tpu.dimension_semantics<parallel>], iteration_bounds = array<i64: 2>, scalar_prefetch = 0 : i64, scratch_operands = 0 : i64, tpu.core_type = #tpu.core_type<tc>, window_params = [{transform_indices = @transform_0, window_bounds = array<i64: 8, 14>}, {pipeline_mode = #tpu.pipeline_mode<synchronous>, transform_indices = @transform_1, window_bounds = array<i64: 32, 14>}, {pipeline_mode = #tpu.pipeline_mode<synchronous>, transform_indices = @transform_2, window_bounds = array<i64: 32, 1>}, {pipeline_mode = #tpu.pipeline_mode<synchronous>, transform_indices = @transform_3, window_bounds = array<i64: 32, 32>}, {pipeline_mode = #tpu.pipeline_mode<synchronous>, transform_indices = @transform_4, window_bounds = array<i64: 32, 1>}, {pipeline_mode = #tpu.pipeline_mode<synchronous>, transform_indices = @transform_5, window_bounds = array<i64: 1, 32>}, {pipeline_mode = #tpu.pipeline_mode<synchronous>, transform_indices = @transform_6, window_bounds = array<i64: 1, 1>}, {transform_indices = @transform_7, window_bounds = array<i64: 1, 1, 8>}]} {
    %c0 = arith.constant 0 : index
    %c0_0 = arith.constant 0 : index
    %0 = vector.load %arg1[%c0, %c0_0] : memref<8x14xf32, #tpu.memory_space<vmem>>, vector<8x14xf32>
    %1 = tpu.transpose %0, [1, 0] : vector<8x14xf32> -> vector<14x8xf32>
    %c0_1 = arith.constant 0 : index
    %c0_2 = arith.constant 0 : index
    %2 = vector.load %arg2[%c0_1, %c0_2] : memref<32x14xf32, #tpu.memory_space<vmem>>, vector<32x14xf32>
    %cst = arith.constant dense<0.000000e+00> : vector<32x8xf32>
    %3 = tpu.matmul %2, %1, %cst {dimension_numbers = #tpu.dot_dimension_numbers<[1], [0], [0], [1], [0, 0, 1, 1], [], []>} : vector<32x14xf32>, vector<14x8xf32>, vector<32x8xf32> -> vector<32x8xf32>
    %c0_3 = arith.constant 0 : index
    %c0_4 = arith.constant 0 : index
    %4 = vector.load %arg3[%c0_3, %c0_4] : memref<32x1xf32, #tpu.memory_space<vmem>>, vector<32x1xf32>
    %5 = vector.broadcast %4 : vector<32x1xf32> to vector<32x8xf32>
    %6 = arith.addf %3, %5 : vector<32x8xf32>
    %cst_5 = arith.constant 0.000000e+00 : f32
    %7 = vector.broadcast %cst_5 : f32 to vector<32x8xf32>
    %8 = arith.maximumf %6, %7 : vector<32x8xf32>
    %c0_6 = arith.constant 0 : index
    %c0_7 = arith.constant 0 : index
    %9 = vector.load %arg4[%c0_6, %c0_7] : memref<32x32xf32, #tpu.memory_space<vmem>>, vector<32x32xf32>
    %cst_8 = arith.constant dense<0.000000e+00> : vector<32x8xf32>
    %10 = tpu.matmul %9, %8, %cst_8 {dimension_numbers = #tpu.dot_dimension_numbers<[1], [0], [0], [1], [0, 0, 1, 1], [], []>} : vector<32x32xf32>, vector<32x8xf32>, vector<32x8xf32> -> vector<32x8xf32>
    %c0_9 = arith.constant 0 : index
    %c0_10 = arith.constant 0 : index
    %11 = vector.load %arg5[%c0_9, %c0_10] : memref<32x1xf32, #tpu.memory_space<vmem>>, vector<32x1xf32>
    %12 = vector.broadcast %11 : vector<32x1xf32> to vector<32x8xf32>
    %13 = arith.addf %10, %12 : vector<32x8xf32>
    %cst_11 = arith.constant 0.000000e+00 : f32
    %14 = vector.broadcast %cst_11 : f32 to vector<32x8xf32>
    %15 = arith.maximumf %13, %14 : vector<32x8xf32>
    %c0_12 = arith.constant 0 : index
    %c0_13 = arith.constant 0 : index
    %16 = vector.load %arg6[%c0_12, %c0_13] : memref<1x32xf32, #tpu.memory_space<vmem>>, vector<1x32xf32>
    %cst_14 = arith.constant dense<0.000000e+00> : vector<1x8xf32>
    %17 = tpu.matmul %16, %15, %cst_14 {dimension_numbers = #tpu.dot_dimension_numbers<[1], [0], [0], [1], [0, 0, 1, 1], [], []>} : vector<1x32xf32>, vector<32x8xf32>, vector<1x8xf32> -> vector<1x8xf32>
    %c0_15 = arith.constant 0 : index
    %c0_16 = arith.constant 0 : index
    %18 = vector.load %arg7[%c0_15, %c0_16] : memref<1x1xf32, #tpu.memory_space<vmem>>, vector<1x1xf32>
    %19 = vector.broadcast %18 : vector<1x1xf32> to vector<1x8xf32>
    %20 = arith.addf %17, %19 : vector<1x8xf32>
    %21 = arith.negf %20 : vector<1x8xf32>
    %22 = math.exp %21 : vector<1x8xf32>
    %cst_17 = arith.constant 1.000000e+00 : f32
    %23 = vector.broadcast %cst_17 : f32 to vector<1x8xf32>
    %24 = arith.addf %23, %22 : vector<1x8xf32>
    %25 = arith.divf %23, %24 : vector<1x8xf32>
    %26 = vector.shape_cast %25 : vector<1x8xf32> to vector<1x1x8xf32>
    %c0_18 = arith.constant 0 : index
    %c0_19 = arith.constant 0 : index
    %c0_20 = arith.constant 0 : index
    %27 = vector.load %arg8[%c0_18, %c0_19, %c0_20] : memref<1x1x8xf32, #tpu.memory_space<vmem>>, vector<1x1x8xf32>
    tpu.vector_store %arg8[%c0_18, %c0_19, %c0_20], %26 {strides = array<i32>} : memref<1x1x8xf32, #tpu.memory_space<vmem>>, vector<1x1x8xf32>,
    return
  }
  func.func @transform_0(%arg0: i32) -> (i32, i32) {
    %c0_i32 = arith.constant 0 : i32
    %c0_i32_0 = arith.constant 0 : i32
    return %arg0, %c0_i32 : i32, i32
  }
  func.func @transform_1(%arg0: i32) -> (i32, i32) {
    %c0_i32 = arith.constant 0 : i32
    %c0_i32_0 = arith.constant 0 : i32
    %c0_i32_1 = arith.constant 0 : i32
    return %c0_i32, %c0_i32_0 : i32, i32
  }
  func.func @transform_2(%arg0: i32) -> (i32, i32) {
    %c0_i32 = arith.constant 0 : i32
    %c0_i32_0 = arith.constant 0 : i32
    %c0_i32_1 = arith.constant 0 : i32
    return %c0_i32, %c0_i32_0 : i32, i32
  }
  func.func @transform_3(%arg0: i32) -> (i32, i32) {
    %c0_i32 = arith.constant 0 : i32
    %c0_i32_0 = arith.constant 0 : i32
    %c0_i32_1 = arith.constant 0 : i32
    return %c0_i32, %c0_i32_0 : i32, i32
  }
  func.func @transform_4(%arg0: i32) -> (i32, i32) {
    %c0_i32 = arith.constant 0 : i32
    %c0_i32_0 = arith.constant 0 : i32
    %c0_i32_1 = arith.constant 0 : i32
    return %c0_i32, %c0_i32_0 : i32, i32
  }
  func.func @transform_5(%arg0: i32) -> (i32, i32) {
    %c0_i32 = arith.constant 0 : i32
    %c0_i32_0 = arith.constant 0 : i32
    %c0_i32_1 = arith.constant 0 : i32
    return %c0_i32, %c0_i32_0 : i32, i32
  }
  func.func @transform_6(%arg0: i32) -> (i32, i32) {
    %c0_i32 = arith.constant 0 : i32
    %c0_i32_0 = arith.constant 0 : i32
    %c0_i32_1 = arith.constant 0 : i32
    return %c0_i32, %c0_i32_0 : i32, i32
  }
  func.func @transform_7(%arg0: i32) -> (i32, i32, i32) {
    %c0_i32 = arith.constant 0 : i32
    %c0_i32_0 = arith.constant 0 : i32
    %c0_i32_1 = arith.constant 0 : i32
    return %arg0, %c0_i32, %c0_i32_0 : i32, i32, i32
  }
}

</mosaic_0001>

<llo_original>
// kernel: tpu_custom_call.1
$region0: #{tpu_custom_call.1}
  #allocation0 [shape = 'u32[]', space=smem, size = 0x4, offset = 0x4, fixed_abs, tag = 'smem constant byte address 0x4 - core index']
  #allocation1 [shape = 'u32[144,128]{1,0:T(1,128)}', space=vmem, size = 0x12000, scoped, tag = 'internal scratch']
  #allocation2 [shape = 'f32[1,1]{1,0:T(1,128)S(1)}', space=vmem, size = 0x200, scoped, tag = 'scoped memory for tpu_custom_call.1']
  %s0 = inlined_call_operand.vmem [shape: f32[16,14], index: 0, kind: input, shape index: {}]
  %s1 = inlined_call_operand.vmem [shape: f32[32,14], index: 1, kind: input, shape index: {}]
  %s2 = inlined_call_operand.vmem [shape: f32[32,1], index: 2, kind: input, shape index: {}]
  %s3 = inlined_call_operand.vmem [shape: f32[32,32], index: 3, kind: input, shape index: {}]
  %s4 = inlined_call_operand.vmem [shape: f32[32,1], index: 4, kind: input, shape index: {}]
  %s5 = inlined_call_operand.vmem [shape: f32[1,32], index: 5, kind: input, shape index: {}]
  %s6 = inlined_call_operand.<no memory space> [shape: f32[1,1], index: 6, kind: input, shape index: {}]
  %s7 = inlined_call_operand.hbm [shape: f32[2,1,8], index: 7, kind: output, shape index: {}]
  %s8 = sld [smem:[#allocation0]]
  $region61: #{tpu_custom_call.1} parent=0
    _
  %s10 = ssub.s32 1, %s8
  %s11 = scalar_select 0, %s10, %s8
  %v12 = vstv %s6
  %13 = vst [vmem:[#allocation2] sm:$0x1] %v12
  $region1: #{tpu_custom_call.1} parent=0
    #allocation3 [shape = 'u8[1024]{0}', space=vmem, size = 0x400, scoped, tag = 'output window, operand 0']
    #allocation4 [shape = 's32[2]{0}', space=sflag, size = 0x8, scoped, tag = 'scoped memory for tpu_custom_call.1']
    %14 = vsyncpa [#allocation4], 0
    %s15 = scalar_lea.sflag [#allocation4], 1
    %16 = vsyncpa %s15, 0
    loop: start=0, step=1, limit=4
    $region2: #{tpu_custom_call.1} parent=1 // loop_pre_header
      _
    $region3: #{tpu_custom_call.1} parent=1 // loop_header
      %s18 = sphi 0, %s22
      %p19 = scmp.ge.s32.totalorder %s18, 4
      %s28 = sphi 0, %s30
      %s31 = sphi 0, %s28
      %s32 = sphi 0, %s31
      %s48 = sphi 0, %s32
      %s52 = sphi 0, %s52
      %s54 = sphi 0, %s52
      %s55 = sphi 0, %s54
      %s69 = sphi 0, %s55
      %s73 = sphi 0, %s73
      %s75 = sphi 0, %s73
      %s76 = sphi 0, %s75
      %s90 = sphi 0, %s76
      %s94 = sphi 0, %s94
      %s96 = sphi 0, %s94
      %s97 = sphi 0, %s96
      %s111 = sphi 0, %s97
      %s115 = sphi 0, %s115
      %s117 = sphi 0, %s115
      %s118 = sphi 0, %s117
      %s132 = sphi 0, %s118
      %s136 = sphi 0, %s136
      %s138 = sphi 0, %s136
      %s139 = sphi 0, %s138
      %s153 = sphi 0, %s139
      %s157 = sphi 0, %s157
      %s159 = sphi 0, %s157
      %s160 = sphi 0, %s159
      %s174 = sphi 0, %s160
      %s180 = sphi 0, %s182
      %s183 = sphi 0, %s180
      %s184 = sphi 0, %s183
      %s200 = sphi 0, %s184
    $region4: #{tpu_custom_call.1} parent=1 // loop_header_branch
      %21 = sbr.rel (%p19) target = $region8
    $region5: #{tpu_custom_call.1} parent=1 // loop_body
      %s23 = ssub.s32 %s18, 1
      %s24 = ssub.s32 %s18, 2
      %s25 = sadd.s32 %s18, 1
      %s26 = ssub.s32 %s18, %s25
      %p27 = scmp.eq.s32.totalorder %s26, 0
      %s29 = sadd.s32 %s28, 1
      %s30 = scalar_select %p27, %s28, %s29
      %p33 = pneg %p27
      %p34 = scmp.eq.s32.totalorder %s18, 1
      %p35 = por %p33, %p34
      %p36 = scmp.ne.s32.totalorder %s28, %s31
      %p37 = scmp.eq.s32.totalorder %s18, 0
      %p38 = por %p36, %p37
      %p39 = scmp.ne.s32.totalorder %s28, %s31
      %p40 = scmp.eq.s32.totalorder %s23, 1
      %p41 = por %p39, %p40
      %p42 = scmp.ne.s32.totalorder %s31, %s32
      %p43 = scmp.eq.s32.totalorder %s23, 0
      %p44 = por %p42, %p43
      %p45 = scmp.ne.s32.totalorder %s31, %s32
      %p46 = scmp.eq.s32.totalorder %s24, 1
      %p47 = por %p45, %p46
      %p49 = scmp.ne.s32.totalorder %s32, %s48
      %p50 = scmp.eq.s32.totalorder %s24, 0
      %p51 = por %p49, %p50
      %s53 = sadd.s32 %s52, 1
      %p56 = scmp.eq.s32.totalorder %s18, 1
      %p57 = scmp.ne.s32.totalorder %s52, %s54
      %p58 = scmp.eq.s32.totalorder %s18, 0
      %p59 = por %p57, %p58
      %p60 = scmp.ne.s32.totalorder %s52, %s54
      %p61 = scmp.eq.s32.totalorder %s23, 1
      %p62 = por %p60, %p61
      %p63 = scmp.ne.s32.totalorder %s54, %s55
      %p64 = scmp.eq.s32.totalorder %s23, 0
      %p65 = por %p63, %p64
      %p66 = scmp.ne.s32.totalorder %s54, %s55
      %p67 = scmp.eq.s32.totalorder %s24, 1
      %p68 = por %p66, %p67
      %p70 = scmp.ne.s32.totalorder %s55, %s69
      %p71 = scmp.eq.s32.totalorder %s24, 0
      %p72 = por %p70, %p71
      %s74 = sadd.s32 %s73, 1
      %p77 = scmp.eq.s32.totalorder %s18, 1
      %p78 = scmp.ne.s32.totalorder %s73, %s75
      %p79 = scmp.eq.s32.totalorder %s18, 0
      %p80 = por %p78, %p79
      %p81 = scmp.ne.s32.totalorder %s73, %s75
      %p82 = scmp.eq.s32.totalorder %s23, 1
      %p83 = por %p81, %p82
      %p84 = scmp.ne.s32.totalorder %s75, %s76
      %p85 = scmp.eq.s32.totalorder %s23, 0
      %p86 = por %p84, %p85
      %p87 = scmp.ne.s32.totalorder %s75, %s76
      %p88 = scmp.eq.s32.totalorder %s24, 1
      %p89 = por %p87, %p88
      %p91 = scmp.ne.s32.totalorder %s76, %s90
      %p92 = scmp.eq.s32.totalorder %s24, 0
      %p93 = por %p91, %p92
      %s95 = sadd.s32 %s94, 1
      %p98 = scmp.eq.s32.totalorder %s18, 1
      %p99 = scmp.ne.s32.totalorder %s94, %s96
      %p100 = scmp.eq.s32.totalorder %s18, 0
      %p101 = por %p99, %p100
      %p102 = scmp.ne.s32.totalorder %s94, %s96
      %p103 = scmp.eq.s32.totalorder %s23, 1
      %p104 = por %p102, %p103
      %p105 = scmp.ne.s32.totalorder %s96, %s97
      %p106 = scmp.eq.s32.totalorder %s23, 0
      %p107 = por %p105, %p106
      %p108 = scmp.ne.s32.totalorder %s96, %s97
      %p109 = scmp.eq.s32.totalorder %s24, 1
      %p110 = por %p108, %p109
      %p112 = scmp.ne.s32.totalorder %s97, %s111
      %p113 = scmp.eq.s32.totalorder %s24, 0
      %p114 = por %p112, %p113
      %s116 = sadd.s32 %s115, 1
      %p119 = scmp.eq.s32.totalorder %s18, 1
      %p120 = scmp.ne.s32.totalorder %s115, %s117
      %p121 = scmp.eq.s32.totalorder %s18, 0
      %p122 = por %p120, %p121
      %p123 = scmp.ne.s32.totalorder %s115, %s117
      %p124 = scmp.eq.s32.totalorder %s23, 1
      %p125 = por %p123, %p124
      %p126 = scmp.ne.s32.totalorder %s117, %s118
      %p127 = scmp.eq.s32.totalorder %s23, 0
      %p128 = por %p126, %p127
      %p129 = scmp.ne.s32.totalorder %s117, %s118
      %p130 = scmp.eq.s32.totalorder %s24, 1
      %p131 = por %p129, %p130
      %p133 = scmp.ne.s32.totalorder %s118, %s132
      %p134 = scmp.eq.s32.totalorder %s24, 0
      %p135 = por %p133, %p134
      %s137 = sadd.s32 %s136, 1
      %p140 = scmp.eq.s32.totalorder %s18, 1
      %p141 = scmp.ne.s32.totalorder %s136, %s138
      %p142 = scmp.eq.s32.totalorder %s18, 0
      %p143 = por %p141, %p142
      %p144 = scmp.ne.s32.totalorder %s136, %s138
      %p145 = scmp.eq.s32.totalorder %s23, 1
      %p146 = por %p144, %p145
      %p147 = scmp.ne.s32.totalorder %s138, %s139
      %p148 = scmp.eq.s32.totalorder %s23, 0
      %p149 = por %p147, %p148
      %p150 = scmp.ne.s32.totalorder %s138, %s139
      %p151 = scmp.eq.s32.totalorder %s24, 1
      %p152 = por %p150, %p151
      %p154 = scmp.ne.s32.totalorder %s139, %s153
      %p155 = scmp.eq.s32.totalorder %s24, 0
      %p156 = por %p154, %p155
      %s158 = sadd.s32 %s157, 1
      %p161 = scmp.eq.s32.totalorder %s18, 1
      %p162 = scmp.ne.s32.totalorder %s157, %s159
      %p163 = scmp.eq.s32.totalorder %s18, 0
      %p164 = por %p162, %p163
      %p165 = scmp.ne.s32.totalorder %s157, %s159
      %p166 = scmp.eq.s32.totalorder %s23, 1
      %p167 = por %p165, %p166
      %p168 = scmp.ne.s32.totalorder %s159, %s160
      %p169 = scmp.eq.s32.totalorder %s23, 0
      %p170 = por %p168, %p169
      %p171 = scmp.ne.s32.totalorder %s159, %s160
      %p172 = scmp.eq.s32.totalorder %s24, 1
      %p173 = por %p171, %p172
      %p175 = scmp.ne.s32.totalorder %s160, %s174
      %p176 = scmp.eq.s32.totalorder %s24, 0
      %p177 = por %p175, %p176
      %s178 = ssub.s32 %s18, %s25
      %p179 = scmp.eq.s32.totalorder %s178, 0
      %s181 = sadd.s32 %s180, 1
      %s182 = scalar_select %p179, %s180, %s181
      %p185 = pneg %p179
      %p186 = scmp.eq.s32.totalorder %s18, 1
      %p187 = por %p185, %p186
      %p188 = scmp.ne.s32.totalorder %s180, %s183
      %p189 = scmp.eq.s32.totalorder %s18, 0
      %p190 = por %p188, %p189
      %p191 = scmp.ne.s32.totalorder %s180, %s183
      %p192 = scmp.eq.s32.totalorder %s23, 1
      %p193 = por %p191, %p192
      %p194 = scmp.ne.s32.totalorder %s183, %s184
      %p195 = scmp.eq.s32.totalorder %s23, 0
      %p196 = por %p194, %p195
      %p197 = scmp.ne.s32.totalorder %s183, %s184
      %p198 = scmp.eq.s32.totalorder %s24, 1
      %p199 = por %p197, %p198
      %p201 = scmp.ne.s32.totalorder %s184, %s200
      %p202 = scmp.eq.s32.totalorder %s24, 0
      %p203 = por %p201, %p202
      %p204 = scmp.le.s32.totalorder 1, %s18
      %p205 = scmp.lt.s32.totalorder %s18, 3
      %p206 = pnand %p204, %p205
      %p207 = pneg %p206
      // Predicated region
      $region9: #{tpu_custom_call.1} parent=5 // pred_check
        _
      $region10: #{tpu_custom_call.1} parent=5 // pred_check_branch
        %209 = sbr.rel (%p206) target = $region12
      $region11: #{tpu_custom_call.1} parent=5 // pred_region
        %s210 = ssub.s32 %s18, 1
        // Predicated region
        $region13: #{tpu_custom_call.1} parent=11 // pred_check
          %p211 = pneg %p65
        $region14: #{tpu_custom_call.1} parent=11 // pred_check_branch
          %213 = sbr.rel (%p211) target = $region16
        $region15: #{tpu_custom_call.1} parent=11 // pred_region
          _
        $region16: #{tpu_custom_call.1} parent=11 // pred_fallthru
          _
        // Predicated region
        $region17: #{tpu_custom_call.1} parent=11 // pred_check
          %p214 = pneg %p86
        $region18: #{tpu_custom_call.1} parent=11 // pred_check_branch
          %216 = sbr.rel (%p214) target = $region20
        $region19: #{tpu_custom_call.1} parent=11 // pred_region
          _
        $region20: #{tpu_custom_call.1} parent=11 // pred_fallthru
          _
        // Predicated region
        $region21: #{tpu_custom_call.1} parent=11 // pred_check
          %p217 = pneg %p107
        $region22: #{tpu_custom_call.1} parent=11 // pred_check_branch
          %219 = sbr.rel (%p217) target = $region24
        $region23: #{tpu_custom_call.1} parent=11 // pred_region
          _
        $region24: #{tpu_custom_call.1} parent=11 // pred_fallthru
          _
        // Predicated region
        $region25: #{tpu_custom_call.1} parent=11 // pred_check
          %p220 = pneg %p128
        $region26: #{tpu_custom_call.1} parent=11 // pred_check_branch
          %222 = sbr.rel (%p220) target = $region28
        $region27: #{tpu_custom_call.1} parent=11 // pred_region
          _
        $region28: #{tpu_custom_call.1} parent=11 // pred_fallthru
          _
        // Predicated region
        $region29: #{tpu_custom_call.1} parent=11 // pred_check
          %p223 = pneg %p149
        $region30: #{tpu_custom_call.1} parent=11 // pred_check_branch
          %225 = sbr.rel (%p223) target = $region32
        $region31: #{tpu_custom_call.1} parent=11 // pred_region
          _
        $region32: #{tpu_custom_call.1} parent=11 // pred_fallthru
          _
        // Predicated region
        $region33: #{tpu_custom_call.1} parent=11 // pred_check
          %p226 = pneg %p170
        $region34: #{tpu_custom_call.1} parent=11 // pred_check_branch
          %228 = sbr.rel (%p226) target = $region36
        $region35: #{tpu_custom_call.1} parent=11 // pred_region
          _
        $region36: #{tpu_custom_call.1} parent=11 // pred_fallthru
          _
      $region12: #{tpu_custom_call.1} parent=5 // pred_fallthru
        _
      %p229 = scmp.lt.s32.totalorder %s18, 2
      // Predicated region
      $region37: #{tpu_custom_call.1} parent=5 // pred_check
        %p230 = pneg %p229
      $region38: #{tpu_custom_call.1} parent=5 // pred_check_branch
        %232 = sbr.rel (%p230) target = $region40
      $region39: #{tpu_custom_call.1} parent=5 // pred_region
        // Predicated region
        $region41: #{tpu_custom_call.1} parent=39 // pred_check
          %p233 = pneg %p38
        $region42: #{tpu_custom_call.1} parent=39 // pred_check_branch
          %235 = sbr.rel (%p233) target = $region44
        $region43: #{tpu_custom_call.1} parent=39 // pred_region
          %p236 = scmp.lt.s32.totalorder %s18, 1
          %s237 = scalar_select %p236, %s18, 1
          %s238 = smul.addr %s237, 8
          %s239 = scalar_lea.vmem %s0, %s238
        $region44: #{tpu_custom_call.1} parent=39 // pred_fallthru
          _
      $region40: #{tpu_custom_call.1} parent=5 // pred_fallthru
        _
      %p240 = scmp.le.s32.totalorder 1, %s18
      %p241 = scmp.lt.s32.totalorder %s18, 3
      %p242 = pnand %p240, %p241
      %p243 = pneg %p242
      // Predicated region
      $region45: #{tpu_custom_call.1} parent=5 // pred_check
        _
      $region46: #{tpu_custom_call.1} parent=5 // pred_check_branch
        %245 = sbr.rel (%p242) target = $region48
      $region47: #{tpu_custom_call.1} parent=5 // pred_region
        %s246 = ssub.s32 %s18, 1
        %p247 = scmp.lt.s32.totalorder %s23, 1
        %s248 = scalar_select %p247, %s23, 1
        %s249 = smul.addr %s248, 8
        %s250 = scalar_lea.vmem %s0, %s249
        %p251 = pneg %p44
        %p252 = pneg %p41
        %p253 = pneg %p65
        %p254 = pneg %p62
        %p255 = pneg %p86
        %p256 = pneg %p83
        %p257 = pneg %p107
        %p258 = pneg %p104
        %p259 = pneg %p128
        %p260 = pneg %p125
        %p261 = pneg %p149
        %p262 = pneg %p146
        %p263 = pneg %p170
        %p264 = pneg %p167
        %p265 = pneg %p196
        %p266 = pneg %p193
        %s267 = sand.u32 %s183, 1
        %s268 = scalar_lea.sflag [#allocation4], %s267
        %s269 = sand.u32 %s183, 1
        %s270 = scalar_lea.vmem [#allocation3], %s269
        %p271 = scmp.lt.s32.totalorder %s23, 1
        %s272 = scalar_select %p271, %s23, 1
        %s273 = smul.addr %s272, 8
        %s274 = scalar_lea.vmem %s0, %s273
        %v275 = vld [vmem:[%s274] sm:$0xff]
        %v276 = vld [vmem:[%s1] sm:$0xff]
        %v277 = vld [vmem:[%s1 + $0x8] sm:$0xff]
        %v278 = vld [vmem:[%s1 + $0x10] sm:$0xff]
        %v279 = vld [vmem:[%s1 + $0x18] sm:$0xff]
        %v280 = vld [vmem:[%s2] sm:$0xff]
        %v281 = vld [vmem:[%s2 + $0x8] sm:$0xff]
        %v282 = vld [vmem:[%s2 + $0x10] sm:$0xff]
        %v283 = vld [vmem:[%s2 + $0x18] sm:$0xff]
        %285 = vset.pattern.permute.xlu0 0
        %286 = vperm.xlu0 %285, %v280
        %v287 = vpop.permute.xlu0 %286
        %290 = vset.pattern.permute.xlu0 0
        %291 = vperm.xlu0 %290, %v281
        %v292 = vpop.permute.xlu0 %291
        %295 = vset.pattern.permute.xlu0 0
        %296 = vperm.xlu0 %295, %v282
        %v297 = vpop.permute.xlu0 %296
        %300 = vset.pattern.permute.xlu0 0
        %301 = vperm.xlu0 %300, %v283
        %v302 = vpop.permute.xlu0 %301
        %vm304 = vcmask 113664
        %v306 = vsel %vm304, %v276, 0
        %v309 = vsel %vm304, %v277, 0
        %v312 = vsel %vm304, %v278, 0
        %v315 = vsel %vm304, %v279, 0
        %v318 = vsel %vm304, %v275, 0
        %320 = vmatprep.subr.mxu0 0.0
        %321 = vmatpush1.xpose.msra.mxu0 %v318
        %322 = vmatprep.subr.mxu0 0.0
        %323 = vmatpush1.xpose.msra.mxu0 0.0
        %324 = vmatprep.subr.mxu0 0.0
        %325 = vmatpush1.xpose.msra.mxu0 0.0
        %326 = vmatprep.subr.mxu0 0.0
        %327 = vmatpush1.xpose.msra.mxu0 0.0
        %328 = vmatprep.subr.mxu0 0.0
        %329 = vmatpush1.xpose.msra.mxu0 0.0
        %330 = vmatprep.subr.mxu0 0.0
        %331 = vmatpush1.xpose.msra.mxu0 0.0
        %332 = vmatprep.subr.mxu0 0.0
        %333 = vmatpush1.xpose.msra.mxu0 0.0
        %334 = vmatprep.subr.mxu0 0.0
        %335 = vmatpush1.xpose.msra.mxu0 0.0
        %336 = vmatprep.subr.mxu0 0.0
        %337 = vmatpush1.xpose.msra.mxu0 0.0
        %338 = vmatprep.subr.mxu0 0.0
        %339 = vmatpush1.xpose.msra.mxu0 0.0
        %340 = vmatprep.subr.mxu0 0.0
        %341 = vmatpush1.xpose.msra.mxu0 0.0
        %342 = vmatprep.subr.mxu0 0.0
        %343 = vmatpush1.xpose.msra.mxu0 0.0
        %344 = vmatprep.subr.mxu0 0.0
        %345 = vmatpush1.xpose.msra.mxu0 0.0
        %346 = vmatprep.subr.mxu0 0.0
        %347 = vmatpush1.xpose.msra.mxu0 0.0
        %348 = vmatprep.subr.mxu0 0.0
        %349 = vmatpush1.xpose.msra.mxu0 0.0
        %350 = vmatprep.subr.mxu0 0.0
        %351 = vmatpush1.xpose.msra.mxu0 0.0
        %352 = vmatprep.subr.mxu0 0.0
        %353 = vmatpush1.xpose.msra.mxu0 0.0
        %354 = vmatprep.subr.mxu0 0.0
        %355 = vmatpush1.xpose.msra.mxu0 0.0
        %356 = vmatprep.subr.mxu0 0.0
        %357 = vmatpush1.xpose.msra.mxu0 0.0
        %358 = vmatprep.subr.mxu0 0.0
        %359 = vmatpush1.xpose.msra.mxu0 0.0
        %360 = vmatprep.subr.mxu0 0.0
        %361 = vmatpush1.xpose.msra.mxu0 0.0
        %362 = vmatprep.subr.mxu0 0.0
        %363 = vmatpush1.xpose.msra.mxu0 0.0
        %364 = vmatprep.subr.mxu0 0.0
        %365 = vmatpush1.xpose.msra.mxu0 0.0
        %366 = vmatprep.subr.mxu0 0.0
        %367 = vmatpush1.xpose.msra.mxu0 0.0
        %368 = vmatprep.subr.mxu0 0.0
        %369 = vmatpush1.xpose.msra.mxu0 0.0
        %370 = vmatprep.subr.mxu0 0.0
        %371 = vmatpush1.xpose.msra.mxu0 0.0
        %372 = vmatprep.subr.mxu0 0.0
        %373 = vmatpush1.xpose.msra.mxu0 0.0
        %374 = vmatprep.subr.mxu0 0.0
        %375 = vmatpush1.xpose.msra.mxu0 0.0
        %376 = vmatprep.subr.mxu0 0.0
        %377 = vmatpush1.xpose.msra.mxu0 0.0
        %378 = vmatprep.subr.mxu0 0.0
        %379 = vmatpush1.xpose.msra.mxu0 0.0
        %380 = vmatprep.subr.mxu0 0.0
        %381 = vmatpush1.xpose.msra.mxu0 0.0
        %382 = vmatprep.subr.mxu0 0.0
        %383 = vmatpush1.xpose.msra.mxu0 0.0
        %384 = vmatprep.mubr.f32.mxu0 0.0
        %385 = vmatmul.mubr.f32.gmra.mrb[0].mxu0 %v306
        %v386 = vpop.f32.mrb[0].mxu0
        %v387 = vadd.f32 %v287, %v386
        %v388 = vpop.f32.mrb[0].mxu0
        %389 = vmatprep.mubr.f32.mxu0 0.0
        %390 = vmatmul.mubr.f32.gmra.mrb[0].mxu0 %v309
        %v391 = vpop.f32.mrb[0].mxu0
        %v392 = vadd.f32 %v292, %v391
        %v393 = vpop.f32.mrb[0].mxu0
        %394 = vmatprep.mubr.f32.mxu0 0.0
        %395 = vmatmul.mubr.f32.gmra.mrb[0].mxu0 %v312
        %v396 = vpop.f32.mrb[0].mxu0
        %v397 = vadd.f32 %v297, %v396
        %v398 = vpop.f32.mrb[0].mxu0
        %399 = vmatprep.mubr.f32.mxu0 0.0
        %400 = vmatmul.mubr.f32.gmra.mrb[0].mxu0 %v315
        %v401 = vpop.f32.mrb[0].mxu0
        %v402 = vadd.f32 %v302, %v401
        %v403 = vpop.f32.mrb[0].mxu0
        %404 = vdwg.mxu0
        %v405 = vmax.f32 %v387, 0.0
        %v406 = vmax.f32 %v392, 0.0
        %v407 = vmax.f32 %v397, 0.0
        %v408 = vmax.f32 %v402, 0.0
        %v409 = vld [vmem:[%s3] sm:$0xff]
        %v410 = vld [vmem:[%s3 + $0x8] sm:$0xff]
        %v411 = vld [vmem:[%s3 + $0x10] sm:$0xff]
        %v412 = vld [vmem:[%s3 + $0x18] sm:$0xff]
        %v413 = vld [vmem:[%s4] sm:$0xff]
        %v414 = vld [vmem:[%s4 + $0x8] sm:$0xff]
        %v415 = vld [vmem:[%s4 + $0x10] sm:$0xff]
        %v416 = vld [vmem:[%s4 + $0x18] sm:$0xff]
        %418 = vset.pattern.permute.xlu0 0
        %419 = vperm.xlu0 %418, %v413
        %v420 = vpop.permute.xlu0 %419
        %423 = vset.pattern.permute.xlu0 0
        %424 = vperm.xlu0 %423, %v414
        %v425 = vpop.permute.xlu0 %424
        %428 = vset.pattern.permute.xlu0 0
        %429 = vperm.xlu0 %428, %v415
        %v430 = vpop.permute.xlu0 %429
        %433 = vset.pattern.permute.xlu0 0
        %434 = vperm.xlu0 %433, %v416
        %v435 = vpop.permute.xlu0 %434
        %vm437 = vcmask 261120
        %v439 = vsel %vm437, %v409, 0
        %v442 = vsel %vm437, %v410, 0
        %v445 = vsel %vm437, %v411, 0
        %v448 = vsel %vm437, %v412, 0
        %450 = vmatprep.subr.mxu0 0.0
        %451 = vmatpush1.msra.mxu0 %v405
        %452 = vmatprep.subr.mxu0 0.0
        %453 = vmatpush1.msra.mxu0 %v406
        %454 = vmatprep.subr.mxu0 0.0
        %455 = vmatpush1.msra.mxu0 %v407
        %456 = vmatprep.subr.mxu0 0.0
        %457 = vmatpush1.msra.mxu0 %v408
        %458 = vmatprep.subr.mxu0 0.0
        %459 = vmatpush1.msra.mxu0 0.0
        %460 = vmatprep.subr.mxu0 0.0
        %461 = vmatpush1.msra.mxu0 0.0
        %462 = vmatprep.subr.mxu0 0.0
        %463 = vmatpush1.msra.mxu0 0.0
        %464 = vmatprep.subr.mxu0 0.0
        %465 = vmatpush1.msra.mxu0 0.0
        %466 = vmatprep.subr.mxu0 0.0
        %467 = vmatpush1.msra.mxu0 0.0
        %468 = vmatprep.subr.mxu0 0.0
        %469 = vmatpush1.msra.mxu0 0.0
        %470 = vmatprep.subr.mxu0 0.0
        %471 = vmatpush1.msra.mxu0 0.0
        %472 = vmatprep.subr.mxu0 0.0
        %473 = vmatpush1.msra.mxu0 0.0
        %474 = vmatprep.subr.mxu0 0.0
        %475 = vmatpush1.msra.mxu0 0.0
        %476 = vmatprep.subr.mxu0 0.0
        %477 = vmatpush1.msra.mxu0 0.0
        %478 = vmatprep.subr.mxu0 0.0
        %479 = vmatpush1.msra.mxu0 0.0
        %480 = vmatprep.subr.mxu0 0.0
        %481 = vmatpush1.msra.mxu0 0.0
        %482 = vmatprep.subr.mxu0 0.0
        %483 = vmatpush1.msra.mxu0 0.0
        %484 = vmatprep.subr.mxu0 0.0
        %485 = vmatpush1.msra.mxu0 0.0
        %486 = vmatprep.subr.mxu0 0.0
        %487 = vmatpush1.msra.mxu0 0.0
        %488 = vmatprep.subr.mxu0 0.0
        %489 = vmatpush1.msra.mxu0 0.0
        %490 = vmatprep.subr.mxu0 0.0
        %491 = vmatpush1.msra.mxu0 0.0
        %492 = vmatprep.subr.mxu0 0.0
        %493 = vmatpush1.msra.mxu0 0.0
        %494 = vmatprep.subr.mxu0 0.0
        %495 = vmatpush1.msra.mxu0 0.0
        %496 = vmatprep.subr.mxu0 0.0
        %497 = vmatpush1.msra.mxu0 0.0
        %498 = vmatprep.subr.mxu0 0.0
        %499 = vmatpush1.msra.mxu0 0.0
        %500 = vmatprep.subr.mxu0 0.0
        %501 = vmatpush1.msra.mxu0 0.0
        %502 = vmatprep.subr.mxu0 0.0
        %503 = vmatpush1.msra.mxu0 0.0
        %504 = vmatprep.subr.mxu0 0.0
        %505 = vmatpush1.msra.mxu0 0.0
        %506 = vmatprep.subr.mxu0 0.0
        %507 = vmatpush1.msra.mxu0 0.0
        %508 = vmatprep.subr.mxu0 0.0
        %509 = vmatpush1.msra.mxu0 0.0
        %510 = vmatprep.subr.mxu0 0.0
        %511 = vmatpush1.msra.mxu0 0.0
        %512 = vmatprep.subr.mxu0 0.0
        %513 = vmatpush1.msra.mxu0 0.0
        %514 = vmatprep.mubr.f32.mxu0 0.0
        %515 = vmatmul.mubr.f32.gmra.mrb[0].mxu0 %v439
        %v516 = vpop.f32.mrb[0].mxu0
        %v517 = vadd.f32 %v420, %v516
        %v518 = vpop.f32.mrb[0].mxu0
        %519 = vmatprep.mubr.f32.mxu0 0.0
        %520 = vmatmul.mubr.f32.gmra.mrb[0].mxu0 %v442
        %v521 = vpop.f32.mrb[0].mxu0
        %v522 = vadd.f32 %v425, %v521
        %v523 = vpop.f32.mrb[0].mxu0
        %524 = vmatprep.mubr.f32.mxu0 0.0
        %525 = vmatmul.mubr.f32.gmra.mrb[0].mxu0 %v445
        %v526 = vpop.f32.mrb[0].mxu0
        %v527 = vadd.f32 %v430, %v526
        %v528 = vpop.f32.mrb[0].mxu0
        %529 = vmatprep.mubr.f32.mxu0 0.0
        %530 = vmatmul.mubr.f32.gmra.mrb[0].mxu0 %v448
        %v531 = vpop.f32.mrb[0].mxu0
        %v532 = vadd.f32 %v435, %v531
        %v533 = vpop.f32.mrb[0].mxu0
        %534 = vdwg.mxu0
        %v535 = vmax.f32 %v517, 0.0
        %v536 = vmax.f32 %v522, 0.0
        %v537 = vmax.f32 %v527, 0.0
        %v538 = vmax.f32 %v532, 0.0
        %v539 = vld [vmem:[%s5] sm:$0x1]
        %v540 = vld [vmem:[#allocation2] sm:$0x1]
        %542 = vset.pattern.permute.xlu0 0
        %543 = vperm.xlu0 %542, %v540
        %v544 = vpop.permute.xlu0 %543
        %v546 = vlaneseq
        %v547 = vshrl.u32 %v546, 7
        %v548 = vsub.s32 0, %v547
        %v549 = vrot.slane %v544, %v548
        %v551 = vsel %vm437, %v539, 0
        %553 = vmatprep.subr.mxu0 0.0
        %554 = vmatpush1.msra.mxu0 %v535
        %555 = vmatprep.subr.mxu0 0.0
        %556 = vmatpush1.msra.mxu0 %v536
        %557 = vmatprep.subr.mxu0 0.0
        %558 = vmatpush1.msra.mxu0 %v537
        %559 = vmatprep.subr.mxu0 0.0
        %560 = vmatpush1.msra.mxu0 %v538
        %561 = vmatprep.subr.mxu0 0.0
        %562 = vmatpush1.msra.mxu0 0.0
        %563 = vmatprep.subr.mxu0 0.0
        %564 = vmatpush1.msra.mxu0 0.0
        %565 = vmatprep.subr.mxu0 0.0
        %566 = vmatpush1.msra.mxu0 0.0
        %567 = vmatprep.subr.mxu0 0.0
        %568 = vmatpush1.msra.mxu0 0.0
        %569 = vmatprep.subr.mxu0 0.0
        %570 = vmatpush1.msra.mxu0 0.0
        %571 = vmatprep.subr.mxu0 0.0
        %572 = vmatpush1.msra.mxu0 0.0
        %573 = vmatprep.subr.mxu0 0.0
        %574 = vmatpush1.msra.mxu0 0.0
        %575 = vmatprep.subr.mxu0 0.0
        %576 = vmatpush1.msra.mxu0 0.0
        %577 = vmatprep.subr.mxu0 0.0
        %578 = vmatpush1.msra.mxu0 0.0
        %579 = vmatprep.subr.mxu0 0.0
        %580 = vmatpush1.msra.mxu0 0.0
        %581 = vmatprep.subr.mxu0 0.0
        %582 = vmatpush1.msra.mxu0 0.0
        %583 = vmatprep.subr.mxu0 0.0
        %584 = vmatpush1.msra.mxu0 0.0
        %585 = vmatprep.subr.mxu0 0.0
        %586 = vmatpush1.msra.mxu0 0.0
        %587 = vmatprep.subr.mxu0 0.0
        %588 = vmatpush1.msra.mxu0 0.0
        %589 = vmatprep.subr.mxu0 0.0
        %590 = vmatpush1.msra.mxu0 0.0
        %591 = vmatprep.subr.mxu0 0.0
        %592 = vmatpush1.msra.mxu0 0.0
        %593 = vmatprep.subr.mxu0 0.0
        %594 = vmatpush1.msra.mxu0 0.0
        %595 = vmatprep.subr.mxu0 0.0
        %596 = vmatpush1.msra.mxu0 0.0
        %597 = vmatprep.subr.mxu0 0.0
        %598 = vmatpush1.msra.mxu0 0.0
        %599 = vmatprep.subr.mxu0 0.0
        %600 = vmatpush1.msra.mxu0 0.0
        %601 = vmatprep.subr.mxu0 0.0
        %602 = vmatpush1.msra.mxu0 0.0
        %603 = vmatprep.subr.mxu0 0.0
        %604 = vmatpush1.msra.mxu0 0.0
        %605 = vmatprep.subr.mxu0 0.0
        %606 = vmatpush1.msra.mxu0 0.0
        %607 = vmatprep.subr.mxu0 0.0
        %608 = vmatpush1.msra.mxu0 0.0
        %609 = vmatprep.subr.mxu0 0.0
        %610 = vmatpush1.msra.mxu0 0.0
        %611 = vmatprep.subr.mxu0 0.0
        %612 = vmatpush1.msra.mxu0 0.0
        %613 = vmatprep.subr.mxu0 0.0
        %614 = vmatpush1.msra.mxu0 0.0
        %615 = vmatprep.subr.mxu0 0.0
        %616 = vmatpush1.msra.mxu0 0.0
        %617 = vmatprep.mubr.f32.mxu0 0.0
        %618 = vmatmul.mubr.f32.gmra.mrb[0].mxu0 %v551
        %v619 = vpop.f32.mrb[0].mxu0
        %v620 = vadd.f32 %v549, %v619
        %v621 = vpop.f32.mrb[0].mxu0
        %622 = vdwg.mxu0
        %v623 = vxor.u32 %v620, 2147483648
        %v624 = vmul.f32 %v623, 1.442695
        %v625 = vpow.pop %v624
        %v626 = vadd.f32 %v625, 1.0
        %v627 = vrcp.pop %v626
        %v628 = vmul.f32 1.0, %v627
        %vm629 = vcmask 57344
        %630 = vst.msk [vmem:[%s270] sm:$0x1] %vm629, %v628
        %s631 = sand.u32 %s183, 1
        %s632 = scalar_lea.sflag [#allocation4], %s631
        %s633 = sand.u32 %s183, 1
        %s634 = scalar_lea.vmem [#allocation3], %s633
        // Predicated region
        $region49: #{tpu_custom_call.1} parent=47 // pred_check
          %p635 = pneg %p193
        $region50: #{tpu_custom_call.1} parent=47 // pred_check_branch
          %637 = sbr.rel (%p635) target = $region52
        $region51: #{tpu_custom_call.1} parent=47 // pred_region
          %s639 = ssub.s32 16, 16
          %640 = vsyncadd %s632, %s639
          %s641 = smul.addr %s23, 16
          %s642 = scalar_lea.hbm %s7, %s641
          %s644 = sshll.u32 %s634, 4
          %s645 = int_to_ptr.vmem [resolvable:$true] %s644
          %647 = dma.vmem_to_hbm [thread:$0]  %s645, 16, %s642, %s632
        $region52: #{tpu_custom_call.1} parent=47 // pred_fallthru
          _
      $region48: #{tpu_custom_call.1} parent=5 // pred_fallthru
        _
      %p648 = scmp.le.s32.totalorder 2, %s18
      // Predicated region
      $region53: #{tpu_custom_call.1} parent=5 // pred_check
        %p649 = pneg %p648
      $region54: #{tpu_custom_call.1} parent=5 // pred_check_branch
        %651 = sbr.rel (%p649) target = $region56
      $region55: #{tpu_custom_call.1} parent=5 // pred_region
        %s652 = ssub.s32 %s18, 2
        // Predicated region
        $region57: #{tpu_custom_call.1} parent=55 // pred_check
          %p653 = pneg %p199
        $region58: #{tpu_custom_call.1} parent=55 // pred_check_branch
          %655 = sbr.rel (%p653) target = $region60
        $region59: #{tpu_custom_call.1} parent=55 // pred_region
          %s656 = sand.u32 %s184, 1
          %s657 = scalar_lea.sflag [#allocation4], %s656
          %s658 = sand.u32 %s184, 1
          %s659 = scalar_lea.vmem [#allocation3], %s658
          %660 = dma.done %s657, 16
        $region60: #{tpu_custom_call.1} parent=55 // pred_fallthru
          _
      $region56: #{tpu_custom_call.1} parent=5 // pred_fallthru
        _
    $region6: #{tpu_custom_call.1} parent=1 // loop_footer
      %s22 = sadd.s32 1, %s18
    $region7: #{tpu_custom_call.1} parent=1 // loop_footer_branch
      %17 = sbr.rel target = $region3
    $region8: #{tpu_custom_call.1} parent=1 // loop_exit
      _
    %661 = vsyncpa [#allocation4], 1
    %s662 = scalar_lea.sflag [#allocation4], 1
    %663 = vsyncpa %s662, 1

</llo_original>
